<compile_context>
chip_gen: v7x
topology: tpu7x:2x2x1
jax: 0.10.0
libtpu: 0.0.40
codegen_flags: <defaults>
</compile_context>

<pallas_src>
import functools

import jax
import jax.numpy as jnp
from jax.experimental import pallas as pl
from jax.experimental.pallas import tpu as pltpu


def _swish(h, approx):
    # sigmoid(h) = 1 / (1 + exp(-h)); exp and the reciprocal retire on the EUP
    # slot, keeping VALU / store slots free.  Single fused expression -> fewer
    # materialized [emb, TB] temporaries (matters most on v5e's 1 vst slot).
    return h * pl.reciprocal(1.0 + jnp.exp(-h), approx=approx)


def _concat_mlp_kernel(xt_ref, w1_ref, b1_ref, w2_ref, b2_ref, w3_ref, b3_ref,
                       o_ref, *, approx_swish):
    """One batch tile. Lane-dense layout: xt_ref [feat, TB] (batch on lanes);
    weights in torch layout [out, in]; biases as columns [out, 1]."""
    # ---- Layer 1 (feat -> emb) on the MXU ----------------------------------
    # Scalar-t contribution is pre-folded into b1 by the wrapper; per-example t
    # rides as extra rows of xt.
    h = jnp.dot(w1_ref[...], xt_ref[...],
                preferred_element_type=jnp.float32) + b1_ref[...]
    h = _swish(h, approx_swish)

    # ---- Layer 2 (emb -> emb) on the MXU ------------------------------------
    h = jnp.dot(w2_ref[...], h, preferred_element_type=jnp.float32) + b2_ref[...]
    h = _swish(h, approx_swish)

    # ---- Layer 3 (emb -> dimx), lane-dense output tile ----------------------
    out = jnp.dot(w3_ref[...], h, preferred_element_type=jnp.float32) + b3_ref[...]
    o_ref[...] = out.astype(o_ref.dtype)


def _round_up(n, m):
    return (n + m - 1) // m * m


def init_concat_mlp_params(key, dimx=3, dimt=1, emb_size=32):
    """torch.nn.Linear-style init (uniform +-1/sqrt(fan_in)); weights in torch
    layout [out, in], biases as column vectors [out, 1]."""
    dims = [(dimx + dimt, emb_size), (emb_size, emb_size), (emb_size, dimx)]
    params = []
    for i, (fan_in, fan_out) in enumerate(dims):
        kw, kb = jax.random.split(jax.random.fold_in(key, i))
        bound = 1.0 / float(fan_in) ** 0.5
        w = jax.random.uniform(kw, (fan_out, fan_in), jnp.float32, -bound, bound)
        b = jax.random.uniform(kb, (fan_out, 1), jnp.float32, -bound, bound)
        params.extend([w, b])
    return tuple(params)


@functools.partial(jax.jit,
                   static_argnames=("dimx", "dimt", "tb_max", "approx_swish"))
def concat_mlp_forward(x, t, params, dimx=3, dimt=1, tb_max=4096,
                       approx_swish=False):
    """x: [B, dimx] f32; t: scalar (broadcast like torch ones(B,1)*t) or [B, dimt]."""
    assert tb_max % 128 == 0
    w1, b1, w2, b2, w3, b3 = params
    B = x.shape[0]
    emb = w1.shape[0]
    x = x.astype(jnp.float32)
    t = jnp.asarray(t, dtype=jnp.float32)

    if t.ndim == 0:
        # Scalar t: fold t * W1[:, dimx:] into the layer-1 bias at trace time
        # (tiny [emb, 1] fusion) -> no concat, no extra kernel input.
        w1_eff = w1[:, :dimx]
        b1_eff = b1 + jnp.sum(w1[:, dimx:], axis=1, keepdims=True) * t
        xt = x
        feat = dimx
    else:
        # Per-example t: the concat is required anyway; it fuses with the
        # transpose/pad below into a single layout pass.
        w1_eff = w1
        b1_eff = b1
        xt = jnp.concatenate([x, t.astype(jnp.float32)], axis=1)
        feat = dimx + dimt

    # Batch tiling: batch rides the 128-lane axis inside the kernel.
    #  * tb <= tb_max (default 4096): per-step VMEM footprint ~1-2 MiB, fits
    #    v5e's 16 MiB scoped default and v7x's 64 MiB physical VMEM easily.
    #  * >= 2 grid steps whenever B > 128 so the "parallel" axis can be split
    #    across v7x's two TensorCores.
    lane = 128
    tb = min(tb_max, max(lane, _round_up(pl.cdiv(B, 2), lane)))
    b_pad = _round_up(B, tb)
    grid = (b_pad // tb,)

    # Single fused layout pass (plumbing only, fuses with the concat above):
    # [B, feat] -> lane-dense [feat, b_pad]. Feature-major callers can skip it.
    xt_fd = jnp.pad(xt.T, ((0, 0), (0, b_pad - B)))

    # Whole-array blocks with constant index_map -> one DMA, VMEM-resident.
    def const(shape):
        return pl.BlockSpec(shape, lambda i: (0, 0))

    kernel = functools.partial(_concat_mlp_kernel, approx_swish=approx_swish)

    out_fd = pl.pallas_call(
        kernel,
        out_shape=jax.ShapeDtypeStruct((dimx, b_pad), jnp.float32),
        grid=grid,
        in_specs=[
            pl.BlockSpec((feat, tb), lambda i: (0, i)),
            const((emb, feat)), const((emb, 1)),
            const((emb, emb)), const((emb, 1)),
            const((dimx, emb)), const((dimx, 1)),
        ],
        out_specs=pl.BlockSpec((dimx, tb), lambda i: (0, i)),
        compiler_params=pltpu.CompilerParams(
            dimension_semantics=("parallel",)),
    )(xt_fd, w1_eff, b1_eff, w2, b2, w3, b3)

    # Tiny ([dimx, B]) layout op back to the torch [B, dimx] convention.
    return out_fd[:, :B].T


def _reference_forward(x, t, params):
    w1, b1, w2, b2, w3, b3 = params
    B = x.shape[0]
    t = jnp.asarray(t, dtype=x.dtype)
    if t.ndim == 0:
        t = jnp.ones((B, 1), dtype=x.dtype) * t
    h = jnp.concatenate([x, t], axis=1)
    h = h @ w1.T + b1[:, 0]
    h = jax.nn.sigmoid(h) * h
    h = h @ w2.T + b2[:, 0]
    h = jax.nn.sigmoid(h) * h
    return h @ w3.T + b3[:, 0]


if __name__ == "__main__":
    key = jax.random.PRNGKey(0)
    kx, kt, kp = jax.random.split(key, 3)

    B, dimx, dimt, emb = 8, 3, 1, 32
    x = jax.random.normal(kx, (B, dimx), dtype=jnp.float32)
    params = init_concat_mlp_params(kp, dimx=dimx, dimt=dimt, emb_size=emb)

    # Scalar t: broadcast (torch's ones(B,1)*t) handled via the bias fold.
    t_scalar = jnp.float32(0.5)
    out = jax.block_until_ready(
        concat_mlp_forward(x, t_scalar, params, dimx=dimx, dimt=dimt))
    ref = _reference_forward(x, t_scalar, params)
    assert out.shape == (B, dimx)
    assert jnp.allclose(out, ref, atol=1e-4, rtol=1e-4), "scalar-t mismatch"

    # Per-example t ([B, dimt]) path (concat fused with the layout pass).
    t_vec = jax.random.uniform(kt, (B, dimt), dtype=jnp.float32)
    out2 = jax.block_until_ready(
        concat_mlp_forward(x, t_vec, params, dimx=dimx, dimt=dimt))
    ref2 = _reference_forward(x, t_vec, params)
    assert out2.shape == (B, dimx)
    assert jnp.allclose(out2, ref2, atol=1e-4, rtol=1e-4), "vector-t mismatch"

    # TODO(synk): ActNorm (actnorm_first=True) with data-dependent init is not
    # part of this forward pass (module default actnorm_first=False).
    print("KERNEL_OK")
</pallas_src>

<mosaic_0001>
module attributes {stable_mosaic.version = 11 : i64} {
  func.func @_concat_mlp_kernel(%arg0: i32, %arg1: memref<3x128xf32, #tpu.memory_space<vmem>>, %arg2: memref<32x3xf32, #tpu.memory_space<vmem>>, %arg3: memref<32x1xf32, #tpu.memory_space<vmem>>, %arg4: memref<32x32xf32, #tpu.memory_space<vmem>>, %arg5: memref<32x1xf32, #tpu.memory_space<vmem>>, %arg6: memref<3x32xf32, #tpu.memory_space<vmem>>, %arg7: memref<3x1xf32, #tpu.memory_space<vmem>>, %arg8: memref<3x128xf32, #tpu.memory_space<vmem>>) attributes {dimension_semantics = [#tpu.dimension_semantics<parallel>], iteration_bounds = array<i64: 1>, scalar_prefetch = 0 : i64, scratch_operands = 0 : i64, tpu.core_type = #tpu.core_type<tc>, window_params = [{transform_indices = @transform_0, window_bounds = array<i64: 3, 128>}, {pipeline_mode = #tpu.pipeline_mode<synchronous>, transform_indices = @transform_1, window_bounds = array<i64: 32, 3>}, {pipeline_mode = #tpu.pipeline_mode<synchronous>, transform_indices = @transform_2, window_bounds = array<i64: 32, 1>}, {pipeline_mode = #tpu.pipeline_mode<synchronous>, transform_indices = @transform_3, window_bounds = array<i64: 32, 32>}, {pipeline_mode = #tpu.pipeline_mode<synchronous>, transform_indices = @transform_4, window_bounds = array<i64: 32, 1>}, {pipeline_mode = #tpu.pipeline_mode<synchronous>, transform_indices = @transform_5, window_bounds = array<i64: 3, 32>}, {pipeline_mode = #tpu.pipeline_mode<synchronous>, transform_indices = @transform_6, window_bounds = array<i64: 3, 1>}, {transform_indices = @transform_7, window_bounds = array<i64: 3, 128>}]} {
    %c0 = arith.constant 0 : index
    %c0_0 = arith.constant 0 : index
    %0 = vector.load %arg2[%c0, %c0_0] : memref<32x3xf32, #tpu.memory_space<vmem>>, vector<32x3xf32>
    %c0_1 = arith.constant 0 : index
    %c0_2 = arith.constant 0 : index
    %1 = vector.load %arg1[%c0_1, %c0_2] : memref<3x128xf32, #tpu.memory_space<vmem>>, vector<3x128xf32>
    %cst = arith.constant dense<0.000000e+00> : vector<32x128xf32>
    %2 = tpu.matmul %0, %1, %cst {dimension_numbers = #tpu.dot_dimension_numbers<[1], [0], [0], [1], [0, 0, 1, 1], [], []>} : vector<32x3xf32>, vector<3x128xf32>, vector<32x128xf32> -> vector<32x128xf32>
    %c0_3 = arith.constant 0 : index
    %c0_4 = arith.constant 0 : index
    %3 = vector.load %arg3[%c0_3, %c0_4] : memref<32x1xf32, #tpu.memory_space<vmem>>, vector<32x1xf32>
    %4 = vector.broadcast %3 : vector<32x1xf32> to vector<32x128xf32>
    %5 = arith.addf %2, %4 : vector<32x128xf32>
    %cst_5 = arith.constant 0.000000e+00 : f32
    %6 = vector.broadcast %cst_5 : f32 to vector<32x128xf32>
    %7 = arith.subf %6, %5 : vector<32x128xf32>
    %8 = math.exp %7 : vector<32x128xf32>
    %cst_6 = arith.constant 1.000000e+00 : f32
    %9 = vector.broadcast %cst_6 : f32 to vector<32x128xf32>
    %10 = arith.addf %9, %8 : vector<32x128xf32>
    %11 = tpu.reciprocal %10 : vector<32x128xf32> -> vector<32x128xf32>
    %12 = arith.mulf %5, %11 : vector<32x128xf32>
    %c0_7 = arith.constant 0 : index
    %c0_8 = arith.constant 0 : index
    %13 = vector.load %arg4[%c0_7, %c0_8] : memref<32x32xf32, #tpu.memory_space<vmem>>, vector<32x32xf32>
    %cst_9 = arith.constant dense<0.000000e+00> : vector<32x128xf32>
    %14 = tpu.matmul %13, %12, %cst_9 {dimension_numbers = #tpu.dot_dimension_numbers<[1], [0], [0], [1], [0, 0, 1, 1], [], []>} : vector<32x32xf32>, vector<32x128xf32>, vector<32x128xf32> -> vector<32x128xf32>
    %c0_10 = arith.constant 0 : index
    %c0_11 = arith.constant 0 : index
    %15 = vector.load %arg5[%c0_10, %c0_11] : memref<32x1xf32, #tpu.memory_space<vmem>>, vector<32x1xf32>
    %16 = vector.broadcast %15 : vector<32x1xf32> to vector<32x128xf32>
    %17 = arith.addf %14, %16 : vector<32x128xf32>
    %cst_12 = arith.constant 0.000000e+00 : f32
    %18 = vector.broadcast %cst_12 : f32 to vector<32x128xf32>
    %19 = arith.subf %18, %17 : vector<32x128xf32>
    %20 = math.exp %19 : vector<32x128xf32>
    %cst_13 = arith.constant 1.000000e+00 : f32
    %21 = vector.broadcast %cst_13 : f32 to vector<32x128xf32>
    %22 = arith.addf %21, %20 : vector<32x128xf32>
    %23 = tpu.reciprocal %22 : vector<32x128xf32> -> vector<32x128xf32>
    %24 = arith.mulf %17, %23 : vector<32x128xf32>
    %c0_14 = arith.constant 0 : index
    %c0_15 = arith.constant 0 : index
    %25 = vector.load %arg6[%c0_14, %c0_15] : memref<3x32xf32, #tpu.memory_space<vmem>>, vector<3x32xf32>
    %cst_16 = arith.constant dense<0.000000e+00> : vector<3x128xf32>
    %26 = tpu.matmul %25, %24, %cst_16 {dimension_numbers = #tpu.dot_dimension_numbers<[1], [0], [0], [1], [0, 0, 1, 1], [], []>} : vector<3x32xf32>, vector<32x128xf32>, vector<3x128xf32> -> vector<3x128xf32>
    %c0_17 = arith.constant 0 : index
    %c0_18 = arith.constant 0 : index
    %27 = vector.load %arg7[%c0_17, %c0_18] : memref<3x1xf32, #tpu.memory_space<vmem>>, vector<3x1xf32>
    %28 = vector.broadcast %27 : vector<3x1xf32> to vector<3x128xf32>
    %29 = arith.addf %26, %28 : vector<3x128xf32>
    %c0_19 = arith.constant 0 : index
    %c0_20 = arith.constant 0 : index
    %30 = vector.load %arg8[%c0_19, %c0_20] : memref<3x128xf32, #tpu.memory_space<vmem>>, vector<3x128xf32>
    tpu.vector_store %arg8[%c0_19, %c0_20], %29 {strides = array<i32>} : memref<3x128xf32, #tpu.memory_space<vmem>>, vector<3x128xf32>,
    return
  }
  func.func @transform_0(%arg0: i32) -> (i32, i32) {
    %c0_i32 = arith.constant 0 : i32
    %c0_i32_0 = arith.constant 0 : i32
    return %c0_i32, %arg0 : i32, i32
  }
  func.func @transform_1(%arg0: i32) -> (i32, i32) {
    %c0_i32 = arith.constant 0 : i32
    %c0_i32_0 = arith.constant 0 : i32
    %c0_i32_1 = arith.constant 0 : i32
    return %c0_i32, %c0_i32_0 : i32, i32
  }
  func.func @transform_2(%arg0: i32) -> (i32, i32) {
    %c0_i32 = arith.constant 0 : i32
    %c0_i32_0 = arith.constant 0 : i32
    %c0_i32_1 = arith.constant 0 : i32
    return %c0_i32, %c0_i32_0 : i32, i32
  }
  func.func @transform_3(%arg0: i32) -> (i32, i32) {
    %c0_i32 = arith.constant 0 : i32
    %c0_i32_0 = arith.constant 0 : i32
    %c0_i32_1 = arith.constant 0 : i32
    return %c0_i32, %c0_i32_0 : i32, i32
  }
  func.func @transform_4(%arg0: i32) -> (i32, i32) {
    %c0_i32 = arith.constant 0 : i32
    %c0_i32_0 = arith.constant 0 : i32
    %c0_i32_1 = arith.constant 0 : i32
    return %c0_i32, %c0_i32_0 : i32, i32
  }
  func.func @transform_5(%arg0: i32) -> (i32, i32) {
    %c0_i32 = arith.constant 0 : i32
    %c0_i32_0 = arith.constant 0 : i32
    %c0_i32_1 = arith.constant 0 : i32
    return %c0_i32, %c0_i32_0 : i32, i32
  }
  func.func @transform_6(%arg0: i32) -> (i32, i32) {
    %c0_i32 = arith.constant 0 : i32
    %c0_i32_0 = arith.constant 0 : i32
    %c0_i32_1 = arith.constant 0 : i32
    return %c0_i32, %c0_i32_0 : i32, i32
  }
  func.func @transform_7(%arg0: i32) -> (i32, i32) {
    %c0_i32 = arith.constant 0 : i32
    %c0_i32_0 = arith.constant 0 : i32
    return %c0_i32, %arg0 : i32, i32
  }
}

</mosaic_0001>

<llo_original>
// kernel: concat_mlp_forward.1
$region0: #{concat_mlp_forward.1}
  #allocation0 [shape = 'u32[]', space=smem, size = 0x4, offset = 0x4, fixed_abs, tag = 'smem constant byte address 0x4 - core index']
  #allocation1 [shape = 'u32[144,128]{1,0:T(1,128)}', space=vmem, size = 0x12000, scoped, tag = 'internal scratch']
  %s0 = inlined_call_operand.vmem [shape: f32[3,128], index: 0, kind: input, shape index: {}]
  %s1 = inlined_call_operand.vmem [shape: f32[32,3], index: 1, kind: input, shape index: {}]
  %s2 = inlined_call_operand.vmem [shape: f32[32,1], index: 2, kind: input, shape index: {}]
  %s3 = inlined_call_operand.vmem [shape: f32[32,32], index: 3, kind: input, shape index: {}]
  %s4 = inlined_call_operand.vmem [shape: f32[32,1], index: 4, kind: input, shape index: {}]
  %s5 = inlined_call_operand.vmem [shape: f32[3,32], index: 5, kind: input, shape index: {}]
  %s6 = inlined_call_operand.vmem [shape: f32[3,1], index: 6, kind: input, shape index: {}]
  %s7 = inlined_call_operand.vmem [shape: f32[3,128], index: 7, kind: output, shape index: {}]
  %s8 = sld [smem:[#allocation0]]
  $region38: #{concat_mlp_forward.1} parent=0
    _
  %s10 = ssub.s32 1, %s8
  %s11 = scalar_select 0, %s10, %s8
  // Predicated region
  $region2: #{concat_mlp_forward.1} parent=0 // pred_check
    _
  $region3: #{concat_mlp_forward.1} parent=0 // pred_check_branch
    %13 = sbr.rel (0) target = $region5
  $region4: #{concat_mlp_forward.1} parent=0 // pred_region
    _
  $region5: #{concat_mlp_forward.1} parent=0 // pred_fallthru
    _
  // Predicated region
  $region6: #{concat_mlp_forward.1} parent=0 // pred_check
    _
  $region7: #{concat_mlp_forward.1} parent=0 // pred_check_branch
    %15 = sbr.rel (0) target = $region9
  $region8: #{concat_mlp_forward.1} parent=0 // pred_region
    _
  $region9: #{concat_mlp_forward.1} parent=0 // pred_fallthru
    _
  // Predicated region
  $region10: #{concat_mlp_forward.1} parent=0 // pred_check
    _
  $region11: #{concat_mlp_forward.1} parent=0 // pred_check_branch
    %17 = sbr.rel (0) target = $region13
  $region12: #{concat_mlp_forward.1} parent=0 // pred_region
    _
  $region13: #{concat_mlp_forward.1} parent=0 // pred_fallthru
    _
  // Predicated region
  $region14: #{concat_mlp_forward.1} parent=0 // pred_check
    _
  $region15: #{concat_mlp_forward.1} parent=0 // pred_check_branch
    %19 = sbr.rel (0) target = $region17
  $region16: #{concat_mlp_forward.1} parent=0 // pred_region
    _
  $region17: #{concat_mlp_forward.1} parent=0 // pred_fallthru
    _
  // Predicated region
  $region18: #{concat_mlp_forward.1} parent=0 // pred_check
    _
  $region19: #{concat_mlp_forward.1} parent=0 // pred_check_branch
    %21 = sbr.rel (0) target = $region21
  $region20: #{concat_mlp_forward.1} parent=0 // pred_region
    _
  $region21: #{concat_mlp_forward.1} parent=0 // pred_fallthru
    _
  // Predicated region
  $region22: #{concat_mlp_forward.1} parent=0 // pred_check
    _
  $region23: #{concat_mlp_forward.1} parent=0 // pred_check_branch
    %23 = sbr.rel (0) target = $region25
  $region24: #{concat_mlp_forward.1} parent=0 // pred_region
    _
  $region25: #{concat_mlp_forward.1} parent=0 // pred_fallthru
    _
  // Predicated region
  $region26: #{concat_mlp_forward.1} parent=0 // pred_check
    _
  $region27: #{concat_mlp_forward.1} parent=0 // pred_check_branch
    %25 = sbr.rel (0) target = $region29
  $region28: #{concat_mlp_forward.1} parent=0 // pred_region
    _
  $region29: #{concat_mlp_forward.1} parent=0 // pred_fallthru
    _
  %v26 = vld [vmem:[%s1] sm:$0xff]
  %v27 = vld [vmem:[%s1 + $0x8] sm:$0xff]
  %v28 = vld [vmem:[%s1 + $0x10] sm:$0xff]
  %v29 = vld [vmem:[%s1 + $0x18] sm:$0xff]
  %v30 = vld [vmem:[%s0] sm:$0x7]
  %v31 = vld [vmem:[%s2] sm:$0xff]
  %v32 = vld [vmem:[%s2 + $0x8] sm:$0xff]
  %v33 = vld [vmem:[%s2 + $0x10] sm:$0xff]
  %v34 = vld [vmem:[%s2 + $0x18] sm:$0xff]
  %36 = vset.pattern.permute.xlu0 0
  %37 = vperm.xlu0 %36, %v31
  %v38 = vpop.permute.xlu0 %37
  %41 = vset.pattern.permute.xlu0 0
  %42 = vperm.xlu0 %41, %v32
  %v43 = vpop.permute.xlu0 %42
  %46 = vset.pattern.permute.xlu0 0
  %47 = vperm.xlu0 %46, %v33
  %v48 = vpop.permute.xlu0 %47
  %51 = vset.pattern.permute.xlu0 0
  %52 = vperm.xlu0 %51, %v34
  %v53 = vpop.permute.xlu0 %52
  %vm55 = vcmask 23552
  %v57 = vsel %vm55, %v26, 0
  %v60 = vsel %vm55, %v27, 0
  %v63 = vsel %vm55, %v28, 0
  %v66 = vsel %vm55, %v29, 0
  %vm68 = vcmask 1042432
  %v70 = vsel %vm68, %v30, 0
  %72 = vmatprep.subr.mxu0 0.0
  %73 = vmatpush1.msra.mxu0 %v70
  %74 = vmatprep.subr.mxu0 0.0
  %75 = vmatpush1.msra.mxu0 0.0
  %76 = vmatprep.subr.mxu0 0.0
  %77 = vmatpush1.msra.mxu0 0.0
  %78 = vmatprep.subr.mxu0 0.0
  %79 = vmatpush1.msra.mxu0 0.0
  %80 = vmatprep.subr.mxu0 0.0
  %81 = vmatpush1.msra.mxu0 0.0
  %82 = vmatprep.subr.mxu0 0.0
  %83 = vmatpush1.msra.mxu0 0.0
  %84 = vmatprep.subr.mxu0 0.0
  %85 = vmatpush1.msra.mxu0 0.0
  %86 = vmatprep.subr.mxu0 0.0
  %87 = vmatpush1.msra.mxu0 0.0
  %88 = vmatprep.subr.mxu0 0.0
  %89 = vmatpush1.msra.mxu0 0.0
  %90 = vmatprep.subr.mxu0 0.0
  %91 = vmatpush1.msra.mxu0 0.0
  %92 = vmatprep.subr.mxu0 0.0
  %93 = vmatpush1.msra.mxu0 0.0
  %94 = vmatprep.subr.mxu0 0.0
  %95 = vmatpush1.msra.mxu0 0.0
  %96 = vmatprep.subr.mxu0 0.0
  %97 = vmatpush1.msra.mxu0 0.0
  %98 = vmatprep.subr.mxu0 0.0
  %99 = vmatpush1.msra.mxu0 0.0
  %100 = vmatprep.subr.mxu0 0.0
  %101 = vmatpush1.msra.mxu0 0.0
  %102 = vmatprep.subr.mxu0 0.0
  %103 = vmatpush1.msra.mxu0 0.0
  %104 = vmatprep.subr.mxu0 0.0
  %105 = vmatpush1.msra.mxu0 0.0
  %106 = vmatprep.subr.mxu0 0.0
  %107 = vmatpush1.msra.mxu0 0.0
  %108 = vmatprep.subr.mxu0 0.0
  %109 = vmatpush1.msra.mxu0 0.0
  %110 = vmatprep.subr.mxu0 0.0
  %111 = vmatpush1.msra.mxu0 0.0
  %112 = vmatprep.subr.mxu0 0.0
  %113 = vmatpush1.msra.mxu0 0.0
  %114 = vmatprep.subr.mxu0 0.0
  %115 = vmatpush1.msra.mxu0 0.0
  %116 = vmatprep.subr.mxu0 0.0
  %117 = vmatpush1.msra.mxu0 0.0
  %118 = vmatprep.subr.mxu0 0.0
  %119 = vmatpush1.msra.mxu0 0.0
  %120 = vmatprep.subr.mxu0 0.0
  %121 = vmatpush1.msra.mxu0 0.0
  %122 = vmatprep.subr.mxu0 0.0
  %123 = vmatpush1.msra.mxu0 0.0
  %124 = vmatprep.subr.mxu0 0.0
  %125 = vmatpush1.msra.mxu0 0.0
  %126 = vmatprep.subr.mxu0 0.0
  %127 = vmatpush1.msra.mxu0 0.0
  %128 = vmatprep.subr.mxu0 0.0
  %129 = vmatpush1.msra.mxu0 0.0
  %130 = vmatprep.subr.mxu0 0.0
  %131 = vmatpush1.msra.mxu0 0.0
  %132 = vmatprep.subr.mxu0 0.0
  %133 = vmatpush1.msra.mxu0 0.0
  %134 = vmatprep.subr.mxu0 0.0
  %135 = vmatpush1.msra.mxu0 0.0
  %136 = vmatprep.mubr.f32.mxu0 0.0
  %137 = vmatmul.mubr.f32.gmra.mrb[0].mxu0 %v57
  %v138 = vpop.f32.mrb[0].mxu0
  %v139 = vadd.f32 %v38, %v138
  %v140 = vpop.f32.mrb[0].mxu0
  %141 = vmatprep.mubr.f32.mxu0 0.0
  %142 = vmatmul.mubr.f32.gmra.mrb[0].mxu0 %v60
  %v143 = vpop.f32.mrb[0].mxu0
  %v144 = vadd.f32 %v43, %v143
  %v145 = vpop.f32.mrb[0].mxu0
  %146 = vmatprep.mubr.f32.mxu0 0.0
  %147 = vmatmul.mubr.f32.gmra.mrb[0].mxu0 %v63
  %v148 = vpop.f32.mrb[0].mxu0
  %v149 = vadd.f32 %v48, %v148
  %v150 = vpop.f32.mrb[0].mxu0
  %151 = vmatprep.mubr.f32.mxu0 0.0
  %152 = vmatmul.mubr.f32.gmra.mrb[0].mxu0 %v66
  %v153 = vpop.f32.mrb[0].mxu0
  %v154 = vadd.f32 %v53, %v153
  %v155 = vpop.f32.mrb[0].mxu0
  %156 = vdwg.mxu0
  %v157 = vsub.f32 0.0, %v139
  %v158 = vsub.f32 0.0, %v144
  %v159 = vsub.f32 0.0, %v149
  %v160 = vsub.f32 0.0, %v154
  %v161 = vmul.f32 %v157, 1.442695
  %v162 = vpow.pop %v161
  %v163 = vmul.f32 %v158, 1.442695
  %v164 = vpow.pop %v163
  %v165 = vmul.f32 %v159, 1.442695
  %v166 = vpow.pop %v165
  %v167 = vmul.f32 %v160, 1.442695
  %v168 = vpow.pop %v167
  %v169 = vadd.f32 %v162, 1.0
  %v170 = vadd.f32 %v164, 1.0
  %v171 = vadd.f32 %v166, 1.0
  %v172 = vadd.f32 %v168, 1.0
  %v173 = vrcp.pop %v169
  %v174 = vrcp.pop %v170
  %v175 = vrcp.pop %v171
  %v176 = vrcp.pop %v172
  %v177 = vmul.f32 %v139, %v173
  %v178 = vmul.f32 %v144, %v174
  %v179 = vmul.f32 %v149, %v175
  %v180 = vmul.f32 %v154, %v176
  %v181 = vld [vmem:[%s3] sm:$0xff]
  %v182 = vld [vmem:[%s3 + $0x8] sm:$0xff]
  %v183 = vld [vmem:[%s3 + $0x10] sm:$0xff]
  %v184 = vld [vmem:[%s3 + $0x18] sm:$0xff]
  %v185 = vld [vmem:[%s4] sm:$0xff]
  %v186 = vld [vmem:[%s4 + $0x8] sm:$0xff]
  %v187 = vld [vmem:[%s4 + $0x10] sm:$0xff]
  %v188 = vld [vmem:[%s4 + $0x18] sm:$0xff]
  %190 = vset.pattern.permute.xlu0 0
  %191 = vperm.xlu0 %190, %v185
  %v192 = vpop.permute.xlu0 %191
  %195 = vset.pattern.permute.xlu0 0
  %196 = vperm.xlu0 %195, %v186
  %v197 = vpop.permute.xlu0 %196
  %200 = vset.pattern.permute.xlu0 0
  %201 = vperm.xlu0 %200, %v187
  %v202 = vpop.permute.xlu0 %201
  %205 = vset.pattern.permute.xlu0 0
  %206 = vperm.xlu0 %205, %v188
  %v207 = vpop.permute.xlu0 %206
  %vm209 = vcmask 261120
  %v211 = vsel %vm209, %v181, 0
  %v214 = vsel %vm209, %v182, 0
  %v217 = vsel %vm209, %v183, 0
  %v220 = vsel %vm209, %v184, 0
  %222 = vmatprep.subr.mxu0 0.0
  %223 = vmatpush1.msra.mxu0 %v177
  %224 = vmatprep.subr.mxu0 0.0
  %225 = vmatpush1.msra.mxu0 %v178
  %226 = vmatprep.subr.mxu0 0.0
  %227 = vmatpush1.msra.mxu0 %v179
  %228 = vmatprep.subr.mxu0 0.0
  %229 = vmatpush1.msra.mxu0 %v180
  %230 = vmatprep.subr.mxu0 0.0
  %231 = vmatpush1.msra.mxu0 0.0
  %232 = vmatprep.subr.mxu0 0.0
  %233 = vmatpush1.msra.mxu0 0.0
  %234 = vmatprep.subr.mxu0 0.0
  %235 = vmatpush1.msra.mxu0 0.0
  %236 = vmatprep.subr.mxu0 0.0
  %237 = vmatpush1.msra.mxu0 0.0
  %238 = vmatprep.subr.mxu0 0.0
  %239 = vmatpush1.msra.mxu0 0.0
  %240 = vmatprep.subr.mxu0 0.0
  %241 = vmatpush1.msra.mxu0 0.0
  %242 = vmatprep.subr.mxu0 0.0
  %243 = vmatpush1.msra.mxu0 0.0
  %244 = vmatprep.subr.mxu0 0.0
  %245 = vmatpush1.msra.mxu0 0.0
  %246 = vmatprep.subr.mxu0 0.0
  %247 = vmatpush1.msra.mxu0 0.0
  %248 = vmatprep.subr.mxu0 0.0
  %249 = vmatpush1.msra.mxu0 0.0
  %250 = vmatprep.subr.mxu0 0.0
  %251 = vmatpush1.msra.mxu0 0.0
  %252 = vmatprep.subr.mxu0 0.0
  %253 = vmatpush1.msra.mxu0 0.0
  %254 = vmatprep.subr.mxu0 0.0
  %255 = vmatpush1.msra.mxu0 0.0
  %256 = vmatprep.subr.mxu0 0.0
  %257 = vmatpush1.msra.mxu0 0.0
  %258 = vmatprep.subr.mxu0 0.0
  %259 = vmatpush1.msra.mxu0 0.0
  %260 = vmatprep.subr.mxu0 0.0
  %261 = vmatpush1.msra.mxu0 0.0
  %262 = vmatprep.subr.mxu0 0.0
  %263 = vmatpush1.msra.mxu0 0.0
  %264 = vmatprep.subr.mxu0 0.0
  %265 = vmatpush1.msra.mxu0 0.0
  %266 = vmatprep.subr.mxu0 0.0
  %267 = vmatpush1.msra.mxu0 0.0
  %268 = vmatprep.subr.mxu0 0.0
  %269 = vmatpush1.msra.mxu0 0.0
  %270 = vmatprep.subr.mxu0 0.0
  %271 = vmatpush1.msra.mxu0 0.0
  %272 = vmatprep.subr.mxu0 0.0
  %273 = vmatpush1.msra.mxu0 0.0
  %274 = vmatprep.subr.mxu0 0.0
  %275 = vmatpush1.msra.mxu0 0.0
  %276 = vmatprep.subr.mxu0 0.0
  %277 = vmatpush1.msra.mxu0 0.0
  %278 = vmatprep.subr.mxu0 0.0
  %279 = vmatpush1.msra.mxu0 0.0
  %280 = vmatprep.subr.mxu0 0.0
  %281 = vmatpush1.msra.mxu0 0.0
  %282 = vmatprep.subr.mxu0 0.0
  %283 = vmatpush1.msra.mxu0 0.0
  %284 = vmatprep.subr.mxu0 0.0
  %285 = vmatpush1.msra.mxu0 0.0
  %286 = vmatprep.mubr.f32.mxu0 0.0
  %287 = vmatmul.mubr.f32.gmra.mrb[0].mxu0 %v211
  %v288 = vpop.f32.mrb[0].mxu0
  %v289 = vadd.f32 %v192, %v288
  %v290 = vpop.f32.mrb[0].mxu0
  %291 = vmatprep.mubr.f32.mxu0 0.0
  %292 = vmatmul.mubr.f32.gmra.mrb[0].mxu0 %v214
  %v293 = vpop.f32.mrb[0].mxu0
  %v294 = vadd.f32 %v197, %v293
  %v295 = vpop.f32.mrb[0].mxu0
  %296 = vmatprep.mubr.f32.mxu0 0.0
  %297 = vmatmul.mubr.f32.gmra.mrb[0].mxu0 %v217
  %v298 = vpop.f32.mrb[0].mxu0
  %v299 = vadd.f32 %v202, %v298
  %v300 = vpop.f32.mrb[0].mxu0
  %301 = vmatprep.mubr.f32.mxu0 0.0
  %302 = vmatmul.mubr.f32.gmra.mrb[0].mxu0 %v220
  %v303 = vpop.f32.mrb[0].mxu0
  %v304 = vadd.f32 %v207, %v303
  %v305 = vpop.f32.mrb[0].mxu0
  %306 = vdwg.mxu0
  %v307 = vsub.f32 0.0, %v289
  %v308 = vsub.f32 0.0, %v294
  %v309 = vsub.f32 0.0, %v299
  %v310 = vsub.f32 0.0, %v304
  %v311 = vmul.f32 %v307, 1.442695
  %v312 = vpow.pop %v311
  %v313 = vmul.f32 %v308, 1.442695
  %v314 = vpow.pop %v313
  %v315 = vmul.f32 %v309, 1.442695
  %v316 = vpow.pop %v315
  %v317 = vmul.f32 %v310, 1.442695
  %v318 = vpow.pop %v317
  %v319 = vadd.f32 %v312, 1.0
  %v320 = vadd.f32 %v314, 1.0
  %v321 = vadd.f32 %v316, 1.0
  %v322 = vadd.f32 %v318, 1.0
  %v323 = vrcp.pop %v319
  %v324 = vrcp.pop %v320
  %v325 = vrcp.pop %v321
  %v326 = vrcp.pop %v322
  %v327 = vmul.f32 %v289, %v323
  %v328 = vmul.f32 %v294, %v324
  %v329 = vmul.f32 %v299, %v325
  %v330 = vmul.f32 %v304, %v326
  %v331 = vld [vmem:[%s5] sm:$0x7]
  %v332 = vld [vmem:[%s6] sm:$0x7]
  %334 = vset.pattern.permute.xlu0 0
  %335 = vperm.xlu0 %334, %v332
  %v336 = vpop.permute.xlu0 %335
  %v339 = vsel %vm209, %v331, 0
  %341 = vmatprep.subr.mxu0 0.0
  %342 = vmatpush1.msra.mxu0 %v327
  %343 = vmatprep.subr.mxu0 0.0
  %344 = vmatpush1.msra.mxu0 %v328
  %345 = vmatprep.subr.mxu0 0.0
  %346 = vmatpush1.msra.mxu0 %v329
  %347 = vmatprep.subr.mxu0 0.0
  %348 = vmatpush1.msra.mxu0 %v330
  %349 = vmatprep.subr.mxu0 0.0
  %350 = vmatpush1.msra.mxu0 0.0
  %351 = vmatprep.subr.mxu0 0.0
  %352 = vmatpush1.msra.mxu0 0.0
  %353 = vmatprep.subr.mxu0 0.0
  %354 = vmatpush1.msra.mxu0 0.0
  %355 = vmatprep.subr.mxu0 0.0
  %356 = vmatpush1.msra.mxu0 0.0
  %357 = vmatprep.subr.mxu0 0.0
  %358 = vmatpush1.msra.mxu0 0.0
  %359 = vmatprep.subr.mxu0 0.0
  %360 = vmatpush1.msra.mxu0 0.0
  %361 = vmatprep.subr.mxu0 0.0
  %362 = vmatpush1.msra.mxu0 0.0
  %363 = vmatprep.subr.mxu0 0.0
  %364 = vmatpush1.msra.mxu0 0.0
  %365 = vmatprep.subr.mxu0 0.0
  %366 = vmatpush1.msra.mxu0 0.0
  %367 = vmatprep.subr.mxu0 0.0
  %368 = vmatpush1.msra.mxu0 0.0
  %369 = vmatprep.subr.mxu0 0.0
  %370 = vmatpush1.msra.mxu0 0.0
  %371 = vmatprep.subr.mxu0 0.0
  %372 = vmatpush1.msra.mxu0 0.0
  %373 = vmatprep.subr.mxu0 0.0
  %374 = vmatpush1.msra.mxu0 0.0
  %375 = vmatprep.subr.mxu0 0.0
  %376 = vmatpush1.msra.mxu0 0.0
  %377 = vmatprep.subr.mxu0 0.0
  %378 = vmatpush1.msra.mxu0 0.0
  %379 = vmatprep.subr.mxu0 0.0
  %380 = vmatpush1.msra.mxu0 0.0
  %381 = vmatprep.subr.mxu0 0.0
  %382 = vmatpush1.msra.mxu0 0.0
  %383 = vmatprep.subr.mxu0 0.0
  %384 = vmatpush1.msra.mxu0 0.0
  %385 = vmatprep.subr.mxu0 0.0
  %386 = vmatpush1.msra.mxu0 0.0
  %387 = vmatprep.subr.mxu0 0.0
  %388 = vmatpush1.msra.mxu0 0.0
  %389 = vmatprep.subr.mxu0 0.0
  %390 = vmatpush1.msra.mxu0 0.0
  %391 = vmatprep.subr.mxu0 0.0
  %392 = vmatpush1.msra.mxu0 0.0
  %393 = vmatprep.subr.mxu0 0.0
  %394 = vmatpush1.msra.mxu0 0.0
  %395 = vmatprep.subr.mxu0 0.0
  %396 = vmatpush1.msra.mxu0 0.0
  %397 = vmatprep.subr.mxu0 0.0
  %398 = vmatpush1.msra.mxu0 0.0
  %399 = vmatprep.subr.mxu0 0.0
  %400 = vmatpush1.msra.mxu0 0.0
  %401 = vmatprep.subr.mxu0 0.0
  %402 = vmatpush1.msra.mxu0 0.0
  %403 = vmatprep.subr.mxu0 0.0
  %404 = vmatpush1.msra.mxu0 0.0
  %405 = vmatprep.mubr.f32.mxu0 0.0
  %406 = vmatmul.mubr.f32.gmra.mrb[0].mxu0 %v339
  %v407 = vpop.f32.mrb[0].mxu0
  %v408 = vadd.f32 %v336, %v407
  %v409 = vpop.f32.mrb[0].mxu0
  %410 = vdwg.mxu0
  %411 = vst [vmem:[%s7] sm:$0x7] %v408
  // Predicated region
  $region30: #{concat_mlp_forward.1} parent=0 // pred_check
    _
  $region31: #{concat_mlp_forward.1} parent=0 // pred_check_branch
    %413 = sbr.rel (0) target = $region33
  $region32: #{concat_mlp_forward.1} parent=0 // pred_region
    _
  $region33: #{concat_mlp_forward.1} parent=0 // pred_fallthru
    _
  // Predicated region
  $region34: #{concat_mlp_forward.1} parent=0 // pred_check
    _
  $region35: #{concat_mlp_forward.1} parent=0 // pred_check_branch
    %415 = sbr.rel (0) target = $region37
  $region36: #{concat_mlp_forward.1} parent=0 // pred_region
    _
  $region37: #{concat_mlp_forward.1} parent=0 // pred_fallthru
    _

</llo_original>
